<compile_context>
chip_gen: v6e
topology: v6e:2x2x1
jax: 0.10.0
libtpu: 0.0.40
codegen_flags: <defaults>
</compile_context>

<pallas_src>
import numpy as np
import jax
import jax.numpy as jnp
from jax.experimental import pallas as pl
from jax.experimental.pallas import tpu as pltpu

_LANES = 128
_SUBLANES = 8
_TARGET_BLOCK_BYTES = 4 * 1024 * 1024      # per-block budget (x4 buffers = 16 MiB)
_MAX_COLS = 32 * 1024                      # widest lane-dense block width
_VMEM_LIMIT_BYTES = 32 * 1024 * 1024       # explicit scoped-VMEM limit (all gens)


def _identity_copy_kernel(x_ref, o_ref):
    # Whole-tile VMEM -> VMEM copy; with output aliased to input this is an
    # in-place streaming copy of one row-tile.
    o_ref[...] = x_ref[...]


def _choose_layout(n: int, itemsize: int):
    """Pick a lane-dense 2-D (rows, cols) view of n elements plus a row tile."""
    block_elems = max(_TARGET_BLOCK_BYTES // itemsize, _LANES * _SUBLANES)

    # Wide lane-dense columns (fewer, larger unmasked vld/vst, fewer grid
    # steps), capped by the per-block budget and by n (avoid padding tiny
    # tensors up to huge widths).
    cols = _LANES
    col_cap = min(block_elems // _SUBLANES, _MAX_COLS)
    while cols * 2 <= col_cap and cols * 2 <= n:
        cols *= 2
    # Shrink back toward 128 if that avoids padding entirely.
    c = cols
    while c > _LANES and n % c != 0:
        c //= 2
    if n % c == 0:
        cols = c

    n_pad = (-(-n // cols)) * cols
    rows = n_pad // cols

    row_budget = max(block_elems // cols, 1)
    if rows <= row_budget:
        tile_r = rows                                  # full-dim block: legal
    else:
        tile_r = max((row_budget // _SUBLANES) * _SUBLANES, _SUBLANES)
    return rows, cols, tile_r, n_pad


def _tiled_identity_copy(x2: jax.Array, tile_r: int) -> jax.Array:
    rows, cols = x2.shape
    n_bytes = x2.size * x2.dtype.itemsize
    return pl.pallas_call(
        _identity_copy_kernel,
        out_shape=jax.ShapeDtypeStruct((rows, cols), x2.dtype),
        grid_spec=pltpu.PrefetchScalarGridSpec(
            num_scalar_prefetch=0,
            grid=(pl.cdiv(rows, tile_r),),
            in_specs=[pl.BlockSpec((tile_r, cols), lambda i: (i, 0))],
            out_specs=pl.BlockSpec((tile_r, cols), lambda i: (i, 0)),
        ),
        compiler_params=pltpu.CompilerParams(
            dimension_semantics=("parallel",),          # shard tiles across TCs (v7x)
            vmem_limit_bytes=_VMEM_LIMIT_BYTES,
        ),
        cost_estimate=pl.CostEstimate(
            flops=0, transcendentals=0, bytes_accessed=2 * n_bytes),
        # forward() is identity: let the output reuse the input's HBM buffer.
        input_output_aliases={0: 0},
    )(x2)


def betavae_forward(x: jax.Array) -> jax.Array:
    """BetaVAE.forward(inputs) -> inputs, via an aliased, pipelined Pallas copy."""
    orig_shape = x.shape
    n = x.size
    if n == 0:
        return x

    rows, cols, tile_r, n_pad = _choose_layout(n, x.dtype.itemsize)

    flat = x.reshape(-1)
    if n_pad != n:
        # Rare fallback (n not a multiple of 128): pad to a lane-dense slab so
        # stores stay unmasked, then slice the valid prefix back out.
        flat = jnp.pad(flat, (0, n_pad - n))

    out2 = _tiled_identity_copy(flat.reshape(rows, cols), tile_r)

    out = out2.reshape(-1)
    if n_pad != n:
        out = out[:n]
    return out.reshape(orig_shape)


class BetaVAEPallas:
    """JAX/Pallas mirror of the PyTorch BetaVAE module (identity forward)."""

    def __init__(self, input_shape, config=None):
        self.config = config or {}
        self.input_shape = list(input_shape)
        self.input_size = int(np.prod(self.input_shape[1:]))
        self.output_shape = None
        self.build()
        # Donate the input so the aliased Pallas output reuses the same HBM
        # buffer (matches PyTorch `return inputs`: output shares storage with
        # the input; no second activation buffer is allocated).
        self._forward = jax.jit(betavae_forward, donate_argnums=0)

    def build(self):
        # Same as reference: output shape equals input shape.
        self.output_shape = self.input_shape
        # TODO(synk): reference BetaVAE.build() defines no encoder/decoder
        # parameters, so there are no weights to initialize or layers to port.

    def forward(self, inputs):
        return self._forward(inputs)


if __name__ == "__main__":
    key = jax.random.PRNGKey(0)
    # NCHW input consistent with the module: batch=2, channels=4, spatial=16x16.
    x = jax.random.normal(key, (2, 4, 16, 16), dtype=jnp.float32)
    x_np = np.asarray(x)  # host snapshot (x's device buffer is donated to forward)

    model = BetaVAEPallas(input_shape=[2, 4, 16, 16], config={})
    y = model.forward(x)
    y = jax.block_until_ready(y)

    assert y.shape == x_np.shape, (y.shape, x_np.shape)
    assert y.dtype == x_np.dtype, (y.dtype, x_np.dtype)
    assert np.array_equal(np.asarray(y), x_np), "identity forward mismatch"
    print("KERNEL_OK")
</pallas_src>

<mosaic_0001>
module attributes {stable_mosaic.version = 11 : i64} {
  func.func @_identity_copy_kernel(%arg0: i32, %arg1: memref<1x2048xf32, #tpu.memory_space<vmem>>, %arg2: memref<1x2048xf32, #tpu.memory_space<vmem>>) attributes {dimension_semantics = [#tpu.dimension_semantics<parallel>], iteration_bounds = array<i64: 1>, scalar_prefetch = 0 : i64, scratch_operands = 0 : i64, tpu.core_type = #tpu.core_type<tc>, window_params = [{transform_indices = @transform_0, window_bounds = array<i64: 1, 2048>}, {transform_indices = @transform_1, window_bounds = array<i64: 1, 2048>}]} {
    %c0 = arith.constant 0 : index
    %c0_0 = arith.constant 0 : index
    %0 = vector.load %arg1[%c0, %c0_0] : memref<1x2048xf32, #tpu.memory_space<vmem>>, vector<1x2048xf32>
    %c0_1 = arith.constant 0 : index
    %c0_2 = arith.constant 0 : index
    %1 = vector.load %arg2[%c0_1, %c0_2] : memref<1x2048xf32, #tpu.memory_space<vmem>>, vector<1x2048xf32>
    tpu.vector_store %arg2[%c0_1, %c0_2], %0 {strides = array<i32>} : memref<1x2048xf32, #tpu.memory_space<vmem>>, vector<1x2048xf32>,
    return
  }
  func.func @transform_0(%arg0: i32) -> (i32, i32) {
    %c0_i32 = arith.constant 0 : i32
    %c0_i32_0 = arith.constant 0 : i32
    return %arg0, %c0_i32 : i32, i32
  }
  func.func @transform_1(%arg0: i32) -> (i32, i32) {
    %c0_i32 = arith.constant 0 : i32
    %c0_i32_0 = arith.constant 0 : i32
    return %arg0, %c0_i32 : i32, i32
  }
}

</mosaic_0001>

<llo_original>
// kernel: betavae_forward.1
$region0: #{betavae_forward.1}
  #allocation0 [shape = 'u32[]', space=smem, size = 0x4, offset = 0x4, fixed_abs, tag = 'smem constant byte address 0x4 - core index']
  #allocation1 [shape = 'u32[144,128]{1,0:T(1,128)}', space=vmem, size = 0x12000, scoped, tag = 'internal scratch']
  %s0 = inlined_call_operand.vmem [shape: f32[1,2048], index: 0, kind: input, shape index: {}, may-alias: {0,1}]
  %s1 = inlined_call_operand.vmem [shape: f32[1,2048], index: 1, kind: output, shape index: {}, may-alias: {0,1}]
  %s2 = sld [smem:[#allocation0]]
  $region14: #{betavae_forward.1} parent=0
    _
  %s4 = ssub.s32 1, %s2
  %s5 = scalar_select 0, %s4, %s2
  // Predicated region
  $region2: #{betavae_forward.1} parent=0 // pred_check
    _
  $region3: #{betavae_forward.1} parent=0 // pred_check_branch
    %7 = sbr.rel (0) target = $region5
  $region4: #{betavae_forward.1} parent=0 // pred_region
    _
  $region5: #{betavae_forward.1} parent=0 // pred_fallthru
    _
  %v8 = vld [vmem:[%s0] sm:$0xff]
  %v9 = vld [vmem:[%s0 + $0x8] sm:$0xff]
  %10 = vst [vmem:[%s1] sm:$0xff] %v8
  %11 = vst [vmem:[%s1 + $0x8] sm:$0xff] %v9
  // Predicated region
  $region6: #{betavae_forward.1} parent=0 // pred_check
    _
  $region7: #{betavae_forward.1} parent=0 // pred_check_branch
    %13 = sbr.rel (0) target = $region9
  $region8: #{betavae_forward.1} parent=0 // pred_region
    _
  $region9: #{betavae_forward.1} parent=0 // pred_fallthru
    _
  // Predicated region
  $region10: #{betavae_forward.1} parent=0 // pred_check
    _
  $region11: #{betavae_forward.1} parent=0 // pred_check_branch
    %15 = sbr.rel (0) target = $region13
  $region12: #{betavae_forward.1} parent=0 // pred_region
    _
  $region13: #{betavae_forward.1} parent=0 // pred_fallthru
    _

</llo_original>
